<compile_context>
chip_gen: v7x
topology: tpu7x:2x2x1
jax: 0.10.0
libtpu: 0.0.40
codegen_flags: <defaults>
</compile_context>

<pallas_src>
import jax
import jax.numpy as jnp
from jax.experimental import pallas as pl
from jax.experimental.pallas import tpu as pltpu


def _round_up(n: int, m: int) -> int:
    return ((n + m - 1) // m) * m


def admodel_kernel(x_ref, w1_ref, b1_ref, w2_ref, b2_ref, w3_ref, b3_ref, o_ref):
    # Feature-major tiles:
    #   x_ref : [2,  TILE_B]      o_ref : [2, TILE_B]
    #   w1_ref: [16, 2]   b1_ref: [16, 1]
    #   w2_ref: [32, 16]  b2_ref: [32, 1]
    #   w3_ref: [2,  32]  b3_ref: [2,  1]
    x = x_ref[...]                                            # [2, TB]

    # Layer 1 (2 -> 16): K = 2 is degenerate for the MXU; compute it as two
    # VPU outer-product multiply-adds (weight columns broadcast over lanes).
    w1 = w1_ref[...]                                          # [16, 2]
    h1 = w1[:, 0:1] * x[0:1, :] + w1[:, 1:2] * x[1:2, :] + b1_ref[...]
    h1 = jnp.maximum(h1, 0.0)                                 # [16, TB]

    # Layer 2 (16 -> 32): MXU, batch on the 128-lane axis.
    h2 = jnp.dot(w2_ref[...], h1, preferred_element_type=jnp.float32) + b2_ref[...]
    h2 = jnp.maximum(h2, 0.0)                                 # [32, TB]

    # Layer 3 (32 -> 2): MXU, output stays lane-dense over the batch.
    o_ref[...] = (
        jnp.dot(w3_ref[...], h2, preferred_element_type=jnp.float32) + b3_ref[...]
    ).astype(o_ref.dtype)


def admodel_forward(action, params, *, tile_b: int = 512):
    """action: [B, 2] float32. Returns [B, 2] float32 (PyTorch ADmodel forward)."""
    B = action.shape[0]

    # Tile sizing: multiple of 128 (lane width), never larger than needed for B.
    # For very large B, tile_b can be swept over 1024 / 2048 / 4096; the VMEM
    # footprint (x + out double-buffered + ~2.5 KB weights) stays tiny on all
    # generations, including the 64 MiB-VMEM v7x.
    tile_b = _round_up(max(tile_b, 128), 128)
    tile_b = min(tile_b, _round_up(B, 128))
    B_pad = _round_up(B, tile_b)
    grid = (pl.cdiv(B_pad, tile_b),)

    # Wrapper-side layout plumbing: [B, 2] -> [2, B_pad] (batch on lanes).
    x_fm = action.T
    if B_pad != B:
        x_fm = jnp.pad(x_fm, ((0, 0), (0, B_pad - B)))

    w1, b1 = params["w1"], params["b1"]                        # [16, 2], [16, 1]
    w2, b2 = params["w2"], params["b2"]                        # [32, 16], [32, 1]
    w3, b3 = params["w3"], params["b3"]                        # [2, 32],  [2, 1]

    # Weights / biases: same block for every grid step -> resident in VMEM.
    resident = lambda shape: pl.BlockSpec(shape, lambda i: (0, 0))

    out_fm = pl.pallas_call(
        admodel_kernel,
        out_shape=jax.ShapeDtypeStruct((2, B_pad), jnp.float32),
        grid=grid,
        in_specs=[
            pl.BlockSpec((2, tile_b), lambda i: (0, i)),       # x tile (pipelined)
            resident(w1.shape), resident(b1.shape),
            resident(w2.shape), resident(b2.shape),
            resident(w3.shape), resident(b3.shape),
        ],
        out_specs=pl.BlockSpec((2, tile_b), lambda i: (0, i)),
        compiler_params=pltpu.CompilerParams(
            dimension_semantics=("parallel",),                 # shard over 2 TCs on v7x
            vmem_limit_bytes=32 * 1024 * 1024,                 # explicit, ample headroom
        ),
    )(x_fm, w1, b1, w2, b2, w3, b3)

    # Drop batch padding and return row-major [B, 2] like PyTorch.
    return out_fm[:, :B].T


def init_params(key):
    """Deterministic init mirroring nn.Linear default (uniform +/- 1/sqrt(fan_in)).

    Weights kept in PyTorch layout [out_features, in_features]; biases [out, 1].
    """
    dims = [(2, 16), (16, 32), (32, 2)]
    params = {}
    for idx, (fan_in, fan_out) in enumerate(dims, start=1):
        key, kw, kb = jax.random.split(key, 3)
        bound = 1.0 / jnp.sqrt(float(fan_in))
        params[f"w{idx}"] = jax.random.uniform(
            kw, (fan_out, fan_in), jnp.float32, minval=-bound, maxval=bound
        )
        params[f"b{idx}"] = jax.random.uniform(
            kb, (fan_out, 1), jnp.float32, minval=-bound, maxval=bound
        )
    return params


def reference_forward(action, params):
    h1 = jnp.maximum(action @ params["w1"].T + params["b1"][:, 0], 0.0)
    h2 = jnp.maximum(h1 @ params["w2"].T + params["b2"][:, 0], 0.0)
    return h2 @ params["w3"].T + params["b3"][:, 0]


if __name__ == "__main__":
    key = jax.random.PRNGKey(0)
    key, kx = jax.random.split(key)

    # Non-multiple-of-tile batch to exercise padding + a multi-step grid
    # (1000 rows of [B, 2] is still only ~8 KB).
    B = 1000
    action = jax.random.normal(kx, (B, 2), jnp.float32)
    params = init_params(key)

    out = jax.block_until_ready(admodel_forward(action, params, tile_b=512))

    ref = reference_forward(action, params)
    assert out.shape == (B, 2)
    assert jnp.allclose(out, ref, atol=1e-4, rtol=1e-4)

    print("KERNEL_OK")
</pallas_src>

<mosaic_0001>
module attributes {stable_mosaic.version = 11 : i64} {
  func.func @admodel_kernel(%arg0: i32, %arg1: memref<2x512xf32, #tpu.memory_space<vmem>>, %arg2: memref<16x2xf32, #tpu.memory_space<vmem>>, %arg3: memref<16x1xf32, #tpu.memory_space<vmem>>, %arg4: memref<32x16xf32, #tpu.memory_space<vmem>>, %arg5: memref<32x1xf32, #tpu.memory_space<vmem>>, %arg6: memref<2x32xf32, #tpu.memory_space<vmem>>, %arg7: memref<2x1xf32, #tpu.memory_space<vmem>>, %arg8: memref<2x512xf32, #tpu.memory_space<vmem>>) attributes {dimension_semantics = [#tpu.dimension_semantics<parallel>], iteration_bounds = array<i64: 2>, scalar_prefetch = 0 : i64, scratch_operands = 0 : i64, tpu.core_type = #tpu.core_type<tc>, window_params = [{transform_indices = @transform_0, window_bounds = array<i64: 2, 512>}, {pipeline_mode = #tpu.pipeline_mode<synchronous>, transform_indices = @transform_1, window_bounds = array<i64: 16, 2>}, {pipeline_mode = #tpu.pipeline_mode<synchronous>, transform_indices = @transform_2, window_bounds = array<i64: 16, 1>}, {pipeline_mode = #tpu.pipeline_mode<synchronous>, transform_indices = @transform_3, window_bounds = array<i64: 32, 16>}, {pipeline_mode = #tpu.pipeline_mode<synchronous>, transform_indices = @transform_4, window_bounds = array<i64: 32, 1>}, {pipeline_mode = #tpu.pipeline_mode<synchronous>, transform_indices = @transform_5, window_bounds = array<i64: 2, 32>}, {pipeline_mode = #tpu.pipeline_mode<synchronous>, transform_indices = @transform_6, window_bounds = array<i64: 2, 1>}, {transform_indices = @transform_7, window_bounds = array<i64: 2, 512>}]} {
    %c0 = arith.constant 0 : index
    %c0_0 = arith.constant 0 : index
    %0 = vector.load %arg1[%c0, %c0_0] : memref<2x512xf32, #tpu.memory_space<vmem>>, vector<2x512xf32>
    %c0_1 = arith.constant 0 : index
    %c0_2 = arith.constant 0 : index
    %1 = vector.load %arg2[%c0_1, %c0_2] : memref<16x2xf32, #tpu.memory_space<vmem>>, vector<16x2xf32>
    %2 = vector.extract_strided_slice %1 {offsets = [0, 0], sizes = [16, 1], strides = [1, 1]} : vector<16x2xf32> to vector<16x1xf32>
    %3 = vector.extract_strided_slice %0 {offsets = [0, 0], sizes = [1, 512], strides = [1, 1]} : vector<2x512xf32> to vector<1x512xf32>
    %4 = vector.broadcast %2 : vector<16x1xf32> to vector<16x512xf32>
    %5 = vector.broadcast %3 : vector<1x512xf32> to vector<16x512xf32>
    %6 = arith.mulf %4, %5 : vector<16x512xf32>
    %7 = vector.extract_strided_slice %1 {offsets = [0, 1], sizes = [16, 1], strides = [1, 1]} : vector<16x2xf32> to vector<16x1xf32>
    %8 = vector.extract_strided_slice %0 {offsets = [1, 0], sizes = [1, 512], strides = [1, 1]} : vector<2x512xf32> to vector<1x512xf32>
    %9 = vector.broadcast %7 : vector<16x1xf32> to vector<16x512xf32>
    %10 = vector.broadcast %8 : vector<1x512xf32> to vector<16x512xf32>
    %11 = arith.mulf %9, %10 : vector<16x512xf32>
    %12 = arith.addf %6, %11 : vector<16x512xf32>
    %c0_3 = arith.constant 0 : index
    %c0_4 = arith.constant 0 : index
    %13 = vector.load %arg3[%c0_3, %c0_4] : memref<16x1xf32, #tpu.memory_space<vmem>>, vector<16x1xf32>
    %14 = vector.broadcast %13 : vector<16x1xf32> to vector<16x512xf32>
    %15 = arith.addf %12, %14 : vector<16x512xf32>
    %cst = arith.constant 0.000000e+00 : f32
    %16 = vector.broadcast %cst : f32 to vector<16x512xf32>
    %17 = arith.maximumf %15, %16 : vector<16x512xf32>
    %c0_5 = arith.constant 0 : index
    %c0_6 = arith.constant 0 : index
    %18 = vector.load %arg4[%c0_5, %c0_6] : memref<32x16xf32, #tpu.memory_space<vmem>>, vector<32x16xf32>
    %cst_7 = arith.constant dense<0.000000e+00> : vector<32x512xf32>
    %19 = tpu.matmul %18, %17, %cst_7 {dimension_numbers = #tpu.dot_dimension_numbers<[1], [0], [0], [1], [0, 0, 1, 1], [], []>} : vector<32x16xf32>, vector<16x512xf32>, vector<32x512xf32> -> vector<32x512xf32>
    %c0_8 = arith.constant 0 : index
    %c0_9 = arith.constant 0 : index
    %20 = vector.load %arg5[%c0_8, %c0_9] : memref<32x1xf32, #tpu.memory_space<vmem>>, vector<32x1xf32>
    %21 = vector.broadcast %20 : vector<32x1xf32> to vector<32x512xf32>
    %22 = arith.addf %19, %21 : vector<32x512xf32>
    %cst_10 = arith.constant 0.000000e+00 : f32
    %23 = vector.broadcast %cst_10 : f32 to vector<32x512xf32>
    %24 = arith.maximumf %22, %23 : vector<32x512xf32>
    %c0_11 = arith.constant 0 : index
    %c0_12 = arith.constant 0 : index
    %25 = vector.load %arg6[%c0_11, %c0_12] : memref<2x32xf32, #tpu.memory_space<vmem>>, vector<2x32xf32>
    %cst_13 = arith.constant dense<0.000000e+00> : vector<2x512xf32>
    %26 = tpu.matmul %25, %24, %cst_13 {dimension_numbers = #tpu.dot_dimension_numbers<[1], [0], [0], [1], [0, 0, 1, 1], [], []>} : vector<2x32xf32>, vector<32x512xf32>, vector<2x512xf32> -> vector<2x512xf32>
    %c0_14 = arith.constant 0 : index
    %c0_15 = arith.constant 0 : index
    %27 = vector.load %arg7[%c0_14, %c0_15] : memref<2x1xf32, #tpu.memory_space<vmem>>, vector<2x1xf32>
    %28 = vector.broadcast %27 : vector<2x1xf32> to vector<2x512xf32>
    %29 = arith.addf %26, %28 : vector<2x512xf32>
    %c0_16 = arith.constant 0 : index
    %c0_17 = arith.constant 0 : index
    %30 = vector.load %arg8[%c0_16, %c0_17] : memref<2x512xf32, #tpu.memory_space<vmem>>, vector<2x512xf32>
    tpu.vector_store %arg8[%c0_16, %c0_17], %29 {strides = array<i32>} : memref<2x512xf32, #tpu.memory_space<vmem>>, vector<2x512xf32>,
    return
  }
  func.func @transform_0(%arg0: i32) -> (i32, i32) {
    %c0_i32 = arith.constant 0 : i32
    %c0_i32_0 = arith.constant 0 : i32
    return %c0_i32, %arg0 : i32, i32
  }
  func.func @transform_1(%arg0: i32) -> (i32, i32) {
    %c0_i32 = arith.constant 0 : i32
    %c0_i32_0 = arith.constant 0 : i32
    %c0_i32_1 = arith.constant 0 : i32
    return %c0_i32, %c0_i32_0 : i32, i32
  }
  func.func @transform_2(%arg0: i32) -> (i32, i32) {
    %c0_i32 = arith.constant 0 : i32
    %c0_i32_0 = arith.constant 0 : i32
    %c0_i32_1 = arith.constant 0 : i32
    return %c0_i32, %c0_i32_0 : i32, i32
  }
  func.func @transform_3(%arg0: i32) -> (i32, i32) {
    %c0_i32 = arith.constant 0 : i32
    %c0_i32_0 = arith.constant 0 : i32
    %c0_i32_1 = arith.constant 0 : i32
    return %c0_i32, %c0_i32_0 : i32, i32
  }
  func.func @transform_4(%arg0: i32) -> (i32, i32) {
    %c0_i32 = arith.constant 0 : i32
    %c0_i32_0 = arith.constant 0 : i32
    %c0_i32_1 = arith.constant 0 : i32
    return %c0_i32, %c0_i32_0 : i32, i32
  }
  func.func @transform_5(%arg0: i32) -> (i32, i32) {
    %c0_i32 = arith.constant 0 : i32
    %c0_i32_0 = arith.constant 0 : i32
    %c0_i32_1 = arith.constant 0 : i32
    return %c0_i32, %c0_i32_0 : i32, i32
  }
  func.func @transform_6(%arg0: i32) -> (i32, i32) {
    %c0_i32 = arith.constant 0 : i32
    %c0_i32_0 = arith.constant 0 : i32
    %c0_i32_1 = arith.constant 0 : i32
    return %c0_i32, %c0_i32_0 : i32, i32
  }
  func.func @transform_7(%arg0: i32) -> (i32, i32) {
    %c0_i32 = arith.constant 0 : i32
    %c0_i32_0 = arith.constant 0 : i32
    return %c0_i32, %arg0 : i32, i32
  }
}

</mosaic_0001>

<llo_original>
// kernel: tpu_custom_call.1
$region0: #{tpu_custom_call.1}
  #allocation0 [shape = 'u32[]', space=smem, size = 0x4, offset = 0x4, fixed_abs, tag = 'smem constant byte address 0x4 - core index']
  #allocation1 [shape = 'u32[144,128]{1,0:T(1,128)}', space=vmem, size = 0x12000, scoped, tag = 'internal scratch']
  %s0 = inlined_call_operand.vmem [shape: f32[2,1024], index: 0, kind: input, shape index: {}]
  %s1 = inlined_call_operand.vmem [shape: f32[16,2], index: 1, kind: input, shape index: {}]
  %s2 = inlined_call_operand.vmem [shape: f32[16,1], index: 2, kind: input, shape index: {}]
  %s3 = inlined_call_operand.vmem [shape: f32[32,16], index: 3, kind: input, shape index: {}]
  %s4 = inlined_call_operand.vmem [shape: f32[32,1], index: 4, kind: input, shape index: {}]
  %s5 = inlined_call_operand.vmem [shape: f32[2,32], index: 5, kind: input, shape index: {}]
  %s6 = inlined_call_operand.vmem [shape: f32[2,1], index: 6, kind: input, shape index: {}]
  %s7 = inlined_call_operand.hbm [shape: f32[2,1024], index: 7, kind: output, shape index: {}]
  %s8 = sld [smem:[#allocation0]]
  $region61: #{tpu_custom_call.1} parent=0
    _
  %s10 = ssub.s32 1, %s8
  %s11 = scalar_select 0, %s10, %s8
  $region1: #{tpu_custom_call.1} parent=0
    #allocation2 [shape = 'u8[8192]{0}', space=vmem, size = 0x2000, scoped, tag = 'output window, operand 0']
    #allocation3 [shape = 's32[2]{0}', space=sflag, size = 0x8, scoped, tag = 'scoped memory for tpu_custom_call.1']
    %12 = vsyncpa [#allocation3], 0
    %s13 = scalar_lea.sflag [#allocation3], 1
    %14 = vsyncpa %s13, 0
    loop: start=0, step=1, limit=4
    $region2: #{tpu_custom_call.1} parent=1 // loop_pre_header
      _
    $region3: #{tpu_custom_call.1} parent=1 // loop_header
      %s16 = sphi 0, %s20
      %p17 = scmp.ge.s32.totalorder %s16, 4
      %s26 = sphi 0, %s28
      %s29 = sphi 0, %s26
      %s30 = sphi 0, %s29
      %s46 = sphi 0, %s30
      %s50 = sphi 0, %s50
      %s52 = sphi 0, %s50
      %s53 = sphi 0, %s52
      %s67 = sphi 0, %s53
      %s71 = sphi 0, %s71
      %s73 = sphi 0, %s71
      %s74 = sphi 0, %s73
      %s88 = sphi 0, %s74
      %s92 = sphi 0, %s92
      %s94 = sphi 0, %s92
      %s95 = sphi 0, %s94
      %s109 = sphi 0, %s95
      %s113 = sphi 0, %s113
      %s115 = sphi 0, %s113
      %s116 = sphi 0, %s115
      %s130 = sphi 0, %s116
      %s134 = sphi 0, %s134
      %s136 = sphi 0, %s134
      %s137 = sphi 0, %s136
      %s151 = sphi 0, %s137
      %s155 = sphi 0, %s155
      %s157 = sphi 0, %s155
      %s158 = sphi 0, %s157
      %s172 = sphi 0, %s158
      %s178 = sphi 0, %s180
      %s181 = sphi 0, %s178
      %s182 = sphi 0, %s181
      %s198 = sphi 0, %s182
    $region4: #{tpu_custom_call.1} parent=1 // loop_header_branch
      %19 = sbr.rel (%p17) target = $region8
    $region5: #{tpu_custom_call.1} parent=1 // loop_body
      %s21 = ssub.s32 %s16, 1
      %s22 = ssub.s32 %s16, 2
      %s23 = sadd.s32 %s16, 1
      %s24 = ssub.s32 %s16, %s23
      %p25 = scmp.eq.s32.totalorder %s24, 0
      %s27 = sadd.s32 %s26, 1
      %s28 = scalar_select %p25, %s26, %s27
      %p31 = pneg %p25
      %p32 = scmp.eq.s32.totalorder %s16, 1
      %p33 = por %p31, %p32
      %p34 = scmp.ne.s32.totalorder %s26, %s29
      %p35 = scmp.eq.s32.totalorder %s16, 0
      %p36 = por %p34, %p35
      %p37 = scmp.ne.s32.totalorder %s26, %s29
      %p38 = scmp.eq.s32.totalorder %s21, 1
      %p39 = por %p37, %p38
      %p40 = scmp.ne.s32.totalorder %s29, %s30
      %p41 = scmp.eq.s32.totalorder %s21, 0
      %p42 = por %p40, %p41
      %p43 = scmp.ne.s32.totalorder %s29, %s30
      %p44 = scmp.eq.s32.totalorder %s22, 1
      %p45 = por %p43, %p44
      %p47 = scmp.ne.s32.totalorder %s30, %s46
      %p48 = scmp.eq.s32.totalorder %s22, 0
      %p49 = por %p47, %p48
      %s51 = sadd.s32 %s50, 1
      %p54 = scmp.eq.s32.totalorder %s16, 1
      %p55 = scmp.ne.s32.totalorder %s50, %s52
      %p56 = scmp.eq.s32.totalorder %s16, 0
      %p57 = por %p55, %p56
      %p58 = scmp.ne.s32.totalorder %s50, %s52
      %p59 = scmp.eq.s32.totalorder %s21, 1
      %p60 = por %p58, %p59
      %p61 = scmp.ne.s32.totalorder %s52, %s53
      %p62 = scmp.eq.s32.totalorder %s21, 0
      %p63 = por %p61, %p62
      %p64 = scmp.ne.s32.totalorder %s52, %s53
      %p65 = scmp.eq.s32.totalorder %s22, 1
      %p66 = por %p64, %p65
      %p68 = scmp.ne.s32.totalorder %s53, %s67
      %p69 = scmp.eq.s32.totalorder %s22, 0
      %p70 = por %p68, %p69
      %s72 = sadd.s32 %s71, 1
      %p75 = scmp.eq.s32.totalorder %s16, 1
      %p76 = scmp.ne.s32.totalorder %s71, %s73
      %p77 = scmp.eq.s32.totalorder %s16, 0
      %p78 = por %p76, %p77
      %p79 = scmp.ne.s32.totalorder %s71, %s73
      %p80 = scmp.eq.s32.totalorder %s21, 1
      %p81 = por %p79, %p80
      %p82 = scmp.ne.s32.totalorder %s73, %s74
      %p83 = scmp.eq.s32.totalorder %s21, 0
      %p84 = por %p82, %p83
      %p85 = scmp.ne.s32.totalorder %s73, %s74
      %p86 = scmp.eq.s32.totalorder %s22, 1
      %p87 = por %p85, %p86
      %p89 = scmp.ne.s32.totalorder %s74, %s88
      %p90 = scmp.eq.s32.totalorder %s22, 0
      %p91 = por %p89, %p90
      %s93 = sadd.s32 %s92, 1
      %p96 = scmp.eq.s32.totalorder %s16, 1
      %p97 = scmp.ne.s32.totalorder %s92, %s94
      %p98 = scmp.eq.s32.totalorder %s16, 0
      %p99 = por %p97, %p98
      %p100 = scmp.ne.s32.totalorder %s92, %s94
      %p101 = scmp.eq.s32.totalorder %s21, 1
      %p102 = por %p100, %p101
      %p103 = scmp.ne.s32.totalorder %s94, %s95
      %p104 = scmp.eq.s32.totalorder %s21, 0
      %p105 = por %p103, %p104
      %p106 = scmp.ne.s32.totalorder %s94, %s95
      %p107 = scmp.eq.s32.totalorder %s22, 1
      %p108 = por %p106, %p107
      %p110 = scmp.ne.s32.totalorder %s95, %s109
      %p111 = scmp.eq.s32.totalorder %s22, 0
      %p112 = por %p110, %p111
      %s114 = sadd.s32 %s113, 1
      %p117 = scmp.eq.s32.totalorder %s16, 1
      %p118 = scmp.ne.s32.totalorder %s113, %s115
      %p119 = scmp.eq.s32.totalorder %s16, 0
      %p120 = por %p118, %p119
      %p121 = scmp.ne.s32.totalorder %s113, %s115
      %p122 = scmp.eq.s32.totalorder %s21, 1
      %p123 = por %p121, %p122
      %p124 = scmp.ne.s32.totalorder %s115, %s116
      %p125 = scmp.eq.s32.totalorder %s21, 0
      %p126 = por %p124, %p125
      %p127 = scmp.ne.s32.totalorder %s115, %s116
      %p128 = scmp.eq.s32.totalorder %s22, 1
      %p129 = por %p127, %p128
      %p131 = scmp.ne.s32.totalorder %s116, %s130
      %p132 = scmp.eq.s32.totalorder %s22, 0
      %p133 = por %p131, %p132
      %s135 = sadd.s32 %s134, 1
      %p138 = scmp.eq.s32.totalorder %s16, 1
      %p139 = scmp.ne.s32.totalorder %s134, %s136
      %p140 = scmp.eq.s32.totalorder %s16, 0
      %p141 = por %p139, %p140
      %p142 = scmp.ne.s32.totalorder %s134, %s136
      %p143 = scmp.eq.s32.totalorder %s21, 1
      %p144 = por %p142, %p143
      %p145 = scmp.ne.s32.totalorder %s136, %s137
      %p146 = scmp.eq.s32.totalorder %s21, 0
      %p147 = por %p145, %p146
      %p148 = scmp.ne.s32.totalorder %s136, %s137
      %p149 = scmp.eq.s32.totalorder %s22, 1
      %p150 = por %p148, %p149
      %p152 = scmp.ne.s32.totalorder %s137, %s151
      %p153 = scmp.eq.s32.totalorder %s22, 0
      %p154 = por %p152, %p153
      %s156 = sadd.s32 %s155, 1
      %p159 = scmp.eq.s32.totalorder %s16, 1
      %p160 = scmp.ne.s32.totalorder %s155, %s157
      %p161 = scmp.eq.s32.totalorder %s16, 0
      %p162 = por %p160, %p161
      %p163 = scmp.ne.s32.totalorder %s155, %s157
      %p164 = scmp.eq.s32.totalorder %s21, 1
      %p165 = por %p163, %p164
      %p166 = scmp.ne.s32.totalorder %s157, %s158
      %p167 = scmp.eq.s32.totalorder %s21, 0
      %p168 = por %p166, %p167
      %p169 = scmp.ne.s32.totalorder %s157, %s158
      %p170 = scmp.eq.s32.totalorder %s22, 1
      %p171 = por %p169, %p170
      %p173 = scmp.ne.s32.totalorder %s158, %s172
      %p174 = scmp.eq.s32.totalorder %s22, 0
      %p175 = por %p173, %p174
      %s176 = ssub.s32 %s16, %s23
      %p177 = scmp.eq.s32.totalorder %s176, 0
      %s179 = sadd.s32 %s178, 1
      %s180 = scalar_select %p177, %s178, %s179
      %p183 = pneg %p177
      %p184 = scmp.eq.s32.totalorder %s16, 1
      %p185 = por %p183, %p184
      %p186 = scmp.ne.s32.totalorder %s178, %s181
      %p187 = scmp.eq.s32.totalorder %s16, 0
      %p188 = por %p186, %p187
      %p189 = scmp.ne.s32.totalorder %s178, %s181
      %p190 = scmp.eq.s32.totalorder %s21, 1
      %p191 = por %p189, %p190
      %p192 = scmp.ne.s32.totalorder %s181, %s182
      %p193 = scmp.eq.s32.totalorder %s21, 0
      %p194 = por %p192, %p193
      %p195 = scmp.ne.s32.totalorder %s181, %s182
      %p196 = scmp.eq.s32.totalorder %s22, 1
      %p197 = por %p195, %p196
      %p199 = scmp.ne.s32.totalorder %s182, %s198
      %p200 = scmp.eq.s32.totalorder %s22, 0
      %p201 = por %p199, %p200
      %p202 = scmp.le.s32.totalorder 1, %s16
      %p203 = scmp.lt.s32.totalorder %s16, 3
      %p204 = pnand %p202, %p203
      %p205 = pneg %p204
      // Predicated region
      $region9: #{tpu_custom_call.1} parent=5 // pred_check
        _
      $region10: #{tpu_custom_call.1} parent=5 // pred_check_branch
        %207 = sbr.rel (%p204) target = $region12
      $region11: #{tpu_custom_call.1} parent=5 // pred_region
        %s208 = ssub.s32 %s16, 1
        // Predicated region
        $region13: #{tpu_custom_call.1} parent=11 // pred_check
          %p209 = pneg %p63
        $region14: #{tpu_custom_call.1} parent=11 // pred_check_branch
          %211 = sbr.rel (%p209) target = $region16
        $region15: #{tpu_custom_call.1} parent=11 // pred_region
          _
        $region16: #{tpu_custom_call.1} parent=11 // pred_fallthru
          _
        // Predicated region
        $region17: #{tpu_custom_call.1} parent=11 // pred_check
          %p212 = pneg %p84
        $region18: #{tpu_custom_call.1} parent=11 // pred_check_branch
          %214 = sbr.rel (%p212) target = $region20
        $region19: #{tpu_custom_call.1} parent=11 // pred_region
          _
        $region20: #{tpu_custom_call.1} parent=11 // pred_fallthru
          _
        // Predicated region
        $region21: #{tpu_custom_call.1} parent=11 // pred_check
          %p215 = pneg %p105
        $region22: #{tpu_custom_call.1} parent=11 // pred_check_branch
          %217 = sbr.rel (%p215) target = $region24
        $region23: #{tpu_custom_call.1} parent=11 // pred_region
          _
        $region24: #{tpu_custom_call.1} parent=11 // pred_fallthru
          _
        // Predicated region
        $region25: #{tpu_custom_call.1} parent=11 // pred_check
          %p218 = pneg %p126
        $region26: #{tpu_custom_call.1} parent=11 // pred_check_branch
          %220 = sbr.rel (%p218) target = $region28
        $region27: #{tpu_custom_call.1} parent=11 // pred_region
          _
        $region28: #{tpu_custom_call.1} parent=11 // pred_fallthru
          _
        // Predicated region
        $region29: #{tpu_custom_call.1} parent=11 // pred_check
          %p221 = pneg %p147
        $region30: #{tpu_custom_call.1} parent=11 // pred_check_branch
          %223 = sbr.rel (%p221) target = $region32
        $region31: #{tpu_custom_call.1} parent=11 // pred_region
          _
        $region32: #{tpu_custom_call.1} parent=11 // pred_fallthru
          _
        // Predicated region
        $region33: #{tpu_custom_call.1} parent=11 // pred_check
          %p224 = pneg %p168
        $region34: #{tpu_custom_call.1} parent=11 // pred_check_branch
          %226 = sbr.rel (%p224) target = $region36
        $region35: #{tpu_custom_call.1} parent=11 // pred_region
          _
        $region36: #{tpu_custom_call.1} parent=11 // pred_fallthru
          _
      $region12: #{tpu_custom_call.1} parent=5 // pred_fallthru
        _
      %p227 = scmp.lt.s32.totalorder %s16, 2
      // Predicated region
      $region37: #{tpu_custom_call.1} parent=5 // pred_check
        %p228 = pneg %p227
      $region38: #{tpu_custom_call.1} parent=5 // pred_check_branch
        %230 = sbr.rel (%p228) target = $region40
      $region39: #{tpu_custom_call.1} parent=5 // pred_region
        // Predicated region
        $region41: #{tpu_custom_call.1} parent=39 // pred_check
          %p231 = pneg %p36
        $region42: #{tpu_custom_call.1} parent=39 // pred_check_branch
          %233 = sbr.rel (%p231) target = $region44
        $region43: #{tpu_custom_call.1} parent=39 // pred_region
          %s234 = smul.u32 4, %s16
          %p235 = scmp.lt.s32.totalorder %s234, 7
          %s236 = scalar_select %p235, %s234, 7
          %s237 = smul.addr %s236, 2
          %s238 = scalar_lea.vmem %s0, %s237
          %s239 = smul.u32 4, %s16
        $region44: #{tpu_custom_call.1} parent=39 // pred_fallthru
          _
      $region40: #{tpu_custom_call.1} parent=5 // pred_fallthru
        _
      %p240 = scmp.le.s32.totalorder 1, %s16
      %p241 = scmp.lt.s32.totalorder %s16, 3
      %p242 = pnand %p240, %p241
      %p243 = pneg %p242
      // Predicated region
      $region45: #{tpu_custom_call.1} parent=5 // pred_check
        _
      $region46: #{tpu_custom_call.1} parent=5 // pred_check_branch
        %245 = sbr.rel (%p242) target = $region48
      $region47: #{tpu_custom_call.1} parent=5 // pred_region
        %s246 = ssub.s32 %s16, 1
        %s247 = smul.u32 4, %s21
        %p248 = scmp.lt.s32.totalorder %s247, 7
        %s249 = scalar_select %p248, %s247, 7
        %s250 = smul.addr %s249, 2
        %s251 = scalar_lea.vmem %s0, %s250
        %p252 = pneg %p42
        %p253 = pneg %p39
        %p254 = pneg %p63
        %p255 = pneg %p60
        %p256 = pneg %p84
        %p257 = pneg %p81
        %p258 = pneg %p105
        %p259 = pneg %p102
        %p260 = pneg %p126
        %p261 = pneg %p123
        %p262 = pneg %p147
        %p263 = pneg %p144
        %p264 = pneg %p168
        %p265 = pneg %p165
        %p266 = pneg %p194
        %p267 = pneg %p191
        %s268 = sand.u32 %s181, 1
        %s269 = scalar_lea.sflag [#allocation3], %s268
        %s270 = sand.u32 %s181, 1
        %s271 = smul.addr %s270, 8
        %s272 = scalar_lea.vmem [#allocation2], %s271
        %s273 = smul.u32 4, %s21
        %p274 = scmp.lt.s32.totalorder %s273, 7
        %s275 = scalar_select %p274, %s273, 7
        %s276 = smul.addr %s275, 2
        %s277 = scalar_lea.vmem %s0, %s276
        %s278 = smul.u32 4, %s21
        %s279 = smul.u32 4, %s21
        %v280 = vld [vmem:[%s277] sm:$0xff]
        %v281 = vld [vmem:[%s1] sm:$0xff]
        %v282 = vld [vmem:[%s1 + $0x8] sm:$0xff]
        %284 = vset.pattern.permute.xlu0 0
        %285 = vperm.xlu0 %284, %v281
        %v286 = vpop.permute.xlu0 %285
        %289 = vset.pattern.permute.xlu0 0
        %290 = vperm.xlu0 %289, %v282
        %v291 = vpop.permute.xlu0 %290
        %v294 = vlaneseq
        %v295 = vshrl.u32 %v294, 7
        %v296 = vsub.s32 0, %v295
        %v297 = vrot.slane %v280, %v296
        %v298 = vlaneseq
        %v299 = vshrl.u32 %v298, 7
        %v300 = vsub.s32 2, %v299
        %v301 = vrot.slane %v280, %v300
        %v302 = vlaneseq
        %v303 = vshrl.u32 %v302, 7
        %v304 = vsub.s32 4, %v303
        %v305 = vrot.slane %v280, %v304
        %v306 = vlaneseq
        %v307 = vshrl.u32 %v306, 7
        %v308 = vsub.s32 6, %v307
        %v309 = vrot.slane %v280, %v308
        %v314 = vlaneseq
        %v315 = vshrl.u32 %v314, 7
        %v316 = vsub.s32 0, %v315
        %v317 = vrot.slane %v297, %v316
        %v318 = vlaneseq
        %v319 = vshrl.u32 %v318, 7
        %v320 = vsub.s32 0, %v319
        %v321 = vrot.slane %v301, %v320
        %v322 = vlaneseq
        %v323 = vshrl.u32 %v322, 7
        %v324 = vsub.s32 0, %v323
        %v325 = vrot.slane %v305, %v324
        %v326 = vlaneseq
        %v327 = vshrl.u32 %v326, 7
        %v328 = vsub.s32 0, %v327
        %v329 = vrot.slane %v309, %v328
        %v330 = vmul.f32 %v286, %v317
        %v331 = vmul.f32 %v286, %v321
        %v332 = vmul.f32 %v286, %v325
        %v333 = vmul.f32 %v286, %v329
        %v334 = vmul.f32 %v291, %v317
        %v335 = vmul.f32 %v291, %v321
        %v336 = vmul.f32 %v291, %v325
        %v337 = vmul.f32 %v291, %v329
        %338 = vset.pattern.permute.xlu0 1
        %339 = vperm.xlu0 %338, %v281
        %v340 = vpop.permute.xlu0 %339
        %342 = vset.pattern.permute.xlu0 1
        %343 = vperm.xlu0 %342, %v282
        %v344 = vpop.permute.xlu0 %343
        %v346 = vlaneseq
        %v347 = vshrl.u32 %v346, 7
        %v348 = vsub.s32 1, %v347
        %v349 = vrot.slane %v280, %v348
        %v350 = vlaneseq
        %v351 = vshrl.u32 %v350, 7
        %v352 = vsub.s32 3, %v351
        %v353 = vrot.slane %v280, %v352
        %v354 = vlaneseq
        %v355 = vshrl.u32 %v354, 7
        %v356 = vsub.s32 5, %v355
        %v357 = vrot.slane %v280, %v356
        %v358 = vlaneseq
        %v359 = vshrl.u32 %v358, 7
        %v360 = vsub.s32 7, %v359
        %v361 = vrot.slane %v280, %v360
        %v366 = vlaneseq
        %v367 = vshrl.u32 %v366, 7
        %v368 = vsub.s32 1, %v367
        %v369 = vrot.slane %v349, %v368
        %v370 = vlaneseq
        %v371 = vshrl.u32 %v370, 7
        %v372 = vsub.s32 1, %v371
        %v373 = vrot.slane %v353, %v372
        %v374 = vlaneseq
        %v375 = vshrl.u32 %v374, 7
        %v376 = vsub.s32 1, %v375
        %v377 = vrot.slane %v357, %v376
        %v378 = vlaneseq
        %v379 = vshrl.u32 %v378, 7
        %v380 = vsub.s32 1, %v379
        %v381 = vrot.slane %v361, %v380
        %v382 = vmul.f32 %v340, %v369
        %v383 = vmul.f32 %v340, %v373
        %v384 = vmul.f32 %v340, %v377
        %v385 = vmul.f32 %v340, %v381
        %v386 = vmul.f32 %v344, %v369
        %v387 = vmul.f32 %v344, %v373
        %v388 = vmul.f32 %v344, %v377
        %v389 = vmul.f32 %v344, %v381
        %v390 = vadd.f32 %v330, %v382
        %v391 = vadd.f32 %v331, %v383
        %v392 = vadd.f32 %v332, %v384
        %v393 = vadd.f32 %v333, %v385
        %v394 = vadd.f32 %v334, %v386
        %v395 = vadd.f32 %v335, %v387
        %v396 = vadd.f32 %v336, %v388
        %v397 = vadd.f32 %v337, %v389
        %v398 = vld [vmem:[%s2] sm:$0xff]
        %v399 = vld [vmem:[%s2 + $0x8] sm:$0xff]
        %401 = vset.pattern.permute.xlu0 0
        %402 = vperm.xlu0 %401, %v398
        %v403 = vpop.permute.xlu0 %402
        %406 = vset.pattern.permute.xlu0 0
        %407 = vperm.xlu0 %406, %v399
        %v408 = vpop.permute.xlu0 %407
        %v410 = vadd.f32 %v390, %v403
        %v411 = vadd.f32 %v391, %v403
        %v412 = vadd.f32 %v392, %v403
        %v413 = vadd.f32 %v393, %v403
        %v414 = vadd.f32 %v394, %v408
        %v415 = vadd.f32 %v395, %v408
        %v416 = vadd.f32 %v396, %v408
        %v417 = vadd.f32 %v397, %v408
        %v418 = vmax.f32 %v410, 0.0
        %v419 = vmax.f32 %v411, 0.0
        %v420 = vmax.f32 %v412, 0.0
        %v421 = vmax.f32 %v413, 0.0
        %v422 = vmax.f32 %v414, 0.0
        %v423 = vmax.f32 %v415, 0.0
        %v424 = vmax.f32 %v416, 0.0
        %v425 = vmax.f32 %v417, 0.0
        %v426 = vld [vmem:[%s3] sm:$0xff]
        %v427 = vld [vmem:[%s3 + $0x8] sm:$0xff]
        %v428 = vld [vmem:[%s3 + $0x10] sm:$0xff]
        %v429 = vld [vmem:[%s3 + $0x18] sm:$0xff]
        %v430 = vld [vmem:[%s4] sm:$0xff]
        %v431 = vld [vmem:[%s4 + $0x8] sm:$0xff]
        %v432 = vld [vmem:[%s4 + $0x10] sm:$0xff]
        %v433 = vld [vmem:[%s4 + $0x18] sm:$0xff]
        %435 = vset.pattern.permute.xlu0 0
        %436 = vperm.xlu0 %435, %v430
        %v437 = vpop.permute.xlu0 %436
        %440 = vset.pattern.permute.xlu0 0
        %441 = vperm.xlu0 %440, %v431
        %v442 = vpop.permute.xlu0 %441
        %445 = vset.pattern.permute.xlu0 0
        %446 = vperm.xlu0 %445, %v432
        %v447 = vpop.permute.xlu0 %446
        %450 = vset.pattern.permute.xlu0 0
        %451 = vperm.xlu0 %450, %v433
        %v452 = vpop.permute.xlu0 %451
        %vm454 = vcmask 130048
        %v456 = vsel %vm454, %v426, 0
        %v459 = vsel %vm454, %v427, 0
        %v462 = vsel %vm454, %v428, 0
        %v465 = vsel %vm454, %v429, 0
        %467 = vmatprep.subr.mxu0 %v419
        %468 = vmatpush1.msra.mxu0 %v418
        %469 = vmatprep.subr.mxu0 %v423
        %470 = vmatpush1.msra.mxu0 %v422
        %471 = vmatprep.subr.mxu0 0.0
        %472 = vmatpush1.msra.mxu0 0.0
        %473 = vmatprep.subr.mxu0 0.0
        %474 = vmatpush1.msra.mxu0 0.0
        %475 = vmatprep.subr.mxu0 0.0
        %476 = vmatpush1.msra.mxu0 0.0
        %477 = vmatprep.subr.mxu0 0.0
        %478 = vmatpush1.msra.mxu0 0.0
        %479 = vmatprep.subr.mxu0 0.0
        %480 = vmatpush1.msra.mxu0 0.0
        %481 = vmatprep.subr.mxu0 0.0
        %482 = vmatpush1.msra.mxu0 0.0
        %483 = vmatprep.subr.mxu0 0.0
        %484 = vmatpush1.msra.mxu0 0.0
        %485 = vmatprep.subr.mxu0 0.0
        %486 = vmatpush1.msra.mxu0 0.0
        %487 = vmatprep.subr.mxu0 0.0
        %488 = vmatpush1.msra.mxu0 0.0
        %489 = vmatprep.subr.mxu0 0.0
        %490 = vmatpush1.msra.mxu0 0.0
        %491 = vmatprep.subr.mxu0 0.0
        %492 = vmatpush1.msra.mxu0 0.0
        %493 = vmatprep.subr.mxu0 0.0
        %494 = vmatpush1.msra.mxu0 0.0
        %495 = vmatprep.subr.mxu0 0.0
        %496 = vmatpush1.msra.mxu0 0.0
        %497 = vmatprep.subr.mxu0 0.0
        %498 = vmatpush1.msra.mxu0 0.0
        %499 = vmatprep.subr.mxu0 0.0
        %500 = vmatpush1.msra.mxu0 0.0
        %501 = vmatprep.subr.mxu0 0.0
        %502 = vmatpush1.msra.mxu0 0.0
        %503 = vmatprep.subr.mxu0 0.0
        %504 = vmatpush1.msra.mxu0 0.0
        %505 = vmatprep.subr.mxu0 0.0
        %506 = vmatpush1.msra.mxu0 0.0
        %507 = vmatprep.subr.mxu0 0.0
        %508 = vmatpush1.msra.mxu0 0.0
        %509 = vmatprep.subr.mxu0 0.0
        %510 = vmatpush1.msra.mxu0 0.0
        %511 = vmatprep.subr.mxu0 0.0
        %512 = vmatpush1.msra.mxu0 0.0
        %513 = vmatprep.subr.mxu0 0.0
        %514 = vmatpush1.msra.mxu0 0.0
        %515 = vmatprep.subr.mxu0 0.0
        %516 = vmatpush1.msra.mxu0 0.0
        %517 = vmatprep.subr.mxu0 0.0
        %518 = vmatpush1.msra.mxu0 0.0
        %519 = vmatprep.subr.mxu0 0.0
        %520 = vmatpush1.msra.mxu0 0.0
        %521 = vmatprep.subr.mxu0 0.0
        %522 = vmatpush1.msra.mxu0 0.0
        %523 = vmatprep.subr.mxu0 0.0
        %524 = vmatpush1.msra.mxu0 0.0
        %525 = vmatprep.subr.mxu0 0.0
        %526 = vmatpush1.msra.mxu0 0.0
        %527 = vmatprep.subr.mxu0 0.0
        %528 = vmatpush1.msra.mxu0 0.0
        %529 = vmatprep.subr.mxu0 0.0
        %530 = vmatpush1.msra.mxu0 0.0
        %531 = vmatprep.mubr.f32.mxu0 0.0
        %532 = vmatmul.mubr.f32.gmra.mrb[0].mxu0 %v456
        %v533 = vpop.f32.mrb[0].mxu0
        %v534 = vadd.f32 %v437, %v533
        %v535 = vpop.f32.mrb[0].mxu0
        %v536 = vadd.f32 %v437, %v535
        %537 = vmatprep.mubr.f32.mxu0 0.0
        %538 = vmatmul.mubr.f32.gmra.mrb[0].mxu0 %v459
        %v539 = vpop.f32.mrb[0].mxu0
        %v540 = vadd.f32 %v442, %v539
        %v541 = vpop.f32.mrb[0].mxu0
        %v542 = vadd.f32 %v442, %v541
        %543 = vmatprep.mubr.f32.mxu0 0.0
        %544 = vmatmul.mubr.f32.gmra.mrb[0].mxu0 %v462
        %v545 = vpop.f32.mrb[0].mxu0
        %v546 = vadd.f32 %v447, %v545
        %v547 = vpop.f32.mrb[0].mxu0
        %v548 = vadd.f32 %v447, %v547
        %549 = vmatprep.mubr.f32.mxu0 0.0
        %550 = vmatmul.mubr.f32.gmra.mrb[0].mxu0 %v465
        %v551 = vpop.f32.mrb[0].mxu0
        %v552 = vadd.f32 %v452, %v551
        %v553 = vpop.f32.mrb[0].mxu0
        %v554 = vadd.f32 %v452, %v553
        %555 = vdwg.mxu0
        %556 = vmatprep.subr.mxu0 %v421
        %557 = vmatpush1.msra.mxu0 %v420
        %558 = vmatprep.subr.mxu0 %v425
        %559 = vmatpush1.msra.mxu0 %v424
        %560 = vmatprep.subr.mxu0 0.0
        %561 = vmatpush1.msra.mxu0 0.0
        %562 = vmatprep.subr.mxu0 0.0
        %563 = vmatpush1.msra.mxu0 0.0
        %564 = vmatprep.subr.mxu0 0.0
        %565 = vmatpush1.msra.mxu0 0.0
        %566 = vmatprep.subr.mxu0 0.0
        %567 = vmatpush1.msra.mxu0 0.0
        %568 = vmatprep.subr.mxu0 0.0
        %569 = vmatpush1.msra.mxu0 0.0
        %570 = vmatprep.subr.mxu0 0.0
        %571 = vmatpush1.msra.mxu0 0.0
        %572 = vmatprep.subr.mxu0 0.0
        %573 = vmatpush1.msra.mxu0 0.0
        %574 = vmatprep.subr.mxu0 0.0
        %575 = vmatpush1.msra.mxu0 0.0
        %576 = vmatprep.subr.mxu0 0.0
        %577 = vmatpush1.msra.mxu0 0.0
        %578 = vmatprep.subr.mxu0 0.0
        %579 = vmatpush1.msra.mxu0 0.0
        %580 = vmatprep.subr.mxu0 0.0
        %581 = vmatpush1.msra.mxu0 0.0
        %582 = vmatprep.subr.mxu0 0.0
        %583 = vmatpush1.msra.mxu0 0.0
        %584 = vmatprep.subr.mxu0 0.0
        %585 = vmatpush1.msra.mxu0 0.0
        %586 = vmatprep.subr.mxu0 0.0
        %587 = vmatpush1.msra.mxu0 0.0
        %588 = vmatprep.subr.mxu0 0.0
        %589 = vmatpush1.msra.mxu0 0.0
        %590 = vmatprep.subr.mxu0 0.0
        %591 = vmatpush1.msra.mxu0 0.0
        %592 = vmatprep.subr.mxu0 0.0
        %593 = vmatpush1.msra.mxu0 0.0
        %594 = vmatprep.subr.mxu0 0.0
        %595 = vmatpush1.msra.mxu0 0.0
        %596 = vmatprep.subr.mxu0 0.0
        %597 = vmatpush1.msra.mxu0 0.0
        %598 = vmatprep.subr.mxu0 0.0
        %599 = vmatpush1.msra.mxu0 0.0
        %600 = vmatprep.subr.mxu0 0.0
        %601 = vmatpush1.msra.mxu0 0.0
        %602 = vmatprep.subr.mxu0 0.0
        %603 = vmatpush1.msra.mxu0 0.0
        %604 = vmatprep.subr.mxu0 0.0
        %605 = vmatpush1.msra.mxu0 0.0
        %606 = vmatprep.subr.mxu0 0.0
        %607 = vmatpush1.msra.mxu0 0.0
        %608 = vmatprep.subr.mxu0 0.0
        %609 = vmatpush1.msra.mxu0 0.0
        %610 = vmatprep.subr.mxu0 0.0
        %611 = vmatpush1.msra.mxu0 0.0
        %612 = vmatprep.subr.mxu0 0.0
        %613 = vmatpush1.msra.mxu0 0.0
        %614 = vmatprep.subr.mxu0 0.0
        %615 = vmatpush1.msra.mxu0 0.0
        %616 = vmatprep.subr.mxu0 0.0
        %617 = vmatpush1.msra.mxu0 0.0
        %618 = vmatprep.subr.mxu0 0.0
        %619 = vmatpush1.msra.mxu0 0.0
        %620 = vmatprep.mubr.f32.mxu0 0.0
        %621 = vmatmul.mubr.f32.gmra.mrb[0].mxu0 %v456
        %v622 = vpop.f32.mrb[0].mxu0
        %v623 = vadd.f32 %v437, %v622
        %v624 = vpop.f32.mrb[0].mxu0
        %v625 = vadd.f32 %v437, %v624
        %626 = vmatprep.mubr.f32.mxu0 0.0
        %627 = vmatmul.mubr.f32.gmra.mrb[0].mxu0 %v459
        %v628 = vpop.f32.mrb[0].mxu0
        %v629 = vadd.f32 %v442, %v628
        %v630 = vpop.f32.mrb[0].mxu0
        %v631 = vadd.f32 %v442, %v630
        %632 = vmatprep.mubr.f32.mxu0 0.0
        %633 = vmatmul.mubr.f32.gmra.mrb[0].mxu0 %v462
        %v634 = vpop.f32.mrb[0].mxu0
        %v635 = vadd.f32 %v447, %v634
        %v636 = vpop.f32.mrb[0].mxu0
        %v637 = vadd.f32 %v447, %v636
        %638 = vmatprep.mubr.f32.mxu0 0.0
        %639 = vmatmul.mubr.f32.gmra.mrb[0].mxu0 %v465
        %v640 = vpop.f32.mrb[0].mxu0
        %v641 = vadd.f32 %v452, %v640
        %v642 = vpop.f32.mrb[0].mxu0
        %v643 = vadd.f32 %v452, %v642
        %644 = vdwg.mxu0
        %v645 = vmax.f32 %v534, 0.0
        %v646 = vmax.f32 %v536, 0.0
        %v647 = vmax.f32 %v623, 0.0
        %v648 = vmax.f32 %v625, 0.0
        %v649 = vmax.f32 %v540, 0.0
        %v650 = vmax.f32 %v542, 0.0
        %v651 = vmax.f32 %v629, 0.0
        %v652 = vmax.f32 %v631, 0.0
        %v653 = vmax.f32 %v546, 0.0
        %v654 = vmax.f32 %v548, 0.0
        %v655 = vmax.f32 %v635, 0.0
        %v656 = vmax.f32 %v637, 0.0
        %v657 = vmax.f32 %v552, 0.0
        %v658 = vmax.f32 %v554, 0.0
        %v659 = vmax.f32 %v641, 0.0
        %v660 = vmax.f32 %v643, 0.0
        %v661 = vld [vmem:[%s5] sm:$0x3]
        %v662 = vld [vmem:[%s6] sm:$0x3]
        %664 = vset.pattern.permute.xlu0 0
        %665 = vperm.xlu0 %664, %v662
        %v666 = vpop.permute.xlu0 %665
        %vm668 = vcmask 261120
        %v670 = vsel %vm668, %v661, 0
        %672 = vmatprep.subr.mxu0 %v646
        %673 = vmatpush1.msra.mxu0 %v645
        %674 = vmatprep.subr.mxu0 %v650
        %675 = vmatpush1.msra.mxu0 %v649
        %676 = vmatprep.subr.mxu0 %v654
        %677 = vmatpush1.msra.mxu0 %v653
        %678 = vmatprep.subr.mxu0 %v658
        %679 = vmatpush1.msra.mxu0 %v657
        %680 = vmatprep.subr.mxu0 0.0
        %681 = vmatpush1.msra.mxu0 0.0
        %682 = vmatprep.subr.mxu0 0.0
        %683 = vmatpush1.msra.mxu0 0.0
        %684 = vmatprep.subr.mxu0 0.0
        %685 = vmatpush1.msra.mxu0 0.0
        %686 = vmatprep.subr.mxu0 0.0
        %687 = vmatpush1.msra.mxu0 0.0
        %688 = vmatprep.subr.mxu0 0.0
        %689 = vmatpush1.msra.mxu0 0.0
        %690 = vmatprep.subr.mxu0 0.0
        %691 = vmatpush1.msra.mxu0 0.0
        %692 = vmatprep.subr.mxu0 0.0
        %693 = vmatpush1.msra.mxu0 0.0
        %694 = vmatprep.subr.mxu0 0.0
        %695 = vmatpush1.msra.mxu0 0.0
        %696 = vmatprep.subr.mxu0 0.0
        %697 = vmatpush1.msra.mxu0 0.0
        %698 = vmatprep.subr.mxu0 0.0
        %699 = vmatpush1.msra.mxu0 0.0
        %700 = vmatprep.subr.mxu0 0.0
        %701 = vmatpush1.msra.mxu0 0.0
        %702 = vmatprep.subr.mxu0 0.0
        %703 = vmatpush1.msra.mxu0 0.0
        %704 = vmatprep.subr.mxu0 0.0
        %705 = vmatpush1.msra.mxu0 0.0
        %706 = vmatprep.subr.mxu0 0.0
        %707 = vmatpush1.msra.mxu0 0.0
        %708 = vmatprep.subr.mxu0 0.0
        %709 = vmatpush1.msra.mxu0 0.0
        %710 = vmatprep.subr.mxu0 0.0
        %711 = vmatpush1.msra.mxu0 0.0
        %712 = vmatprep.subr.mxu0 0.0
        %713 = vmatpush1.msra.mxu0 0.0
        %714 = vmatprep.subr.mxu0 0.0
        %715 = vmatpush1.msra.mxu0 0.0
        %716 = vmatprep.subr.mxu0 0.0
        %717 = vmatpush1.msra.mxu0 0.0
        %718 = vmatprep.subr.mxu0 0.0
        %719 = vmatpush1.msra.mxu0 0.0
        %720 = vmatprep.subr.mxu0 0.0
        %721 = vmatpush1.msra.mxu0 0.0
        %722 = vmatprep.subr.mxu0 0.0
        %723 = vmatpush1.msra.mxu0 0.0
        %724 = vmatprep.subr.mxu0 0.0
        %725 = vmatpush1.msra.mxu0 0.0
        %726 = vmatprep.subr.mxu0 0.0
        %727 = vmatpush1.msra.mxu0 0.0
        %728 = vmatprep.subr.mxu0 0.0
        %729 = vmatpush1.msra.mxu0 0.0
        %730 = vmatprep.subr.mxu0 0.0
        %731 = vmatpush1.msra.mxu0 0.0
        %732 = vmatprep.subr.mxu0 0.0
        %733 = vmatpush1.msra.mxu0 0.0
        %734 = vmatprep.subr.mxu0 0.0
        %735 = vmatpush1.msra.mxu0 0.0
        %736 = vmatprep.mubr.f32.mxu0 0.0
        %737 = vmatmul.mubr.f32.gmra.mrb[0].mxu0 %v670
        %v738 = vpop.f32.mrb[0].mxu0
        %v739 = vadd.f32 %v666, %v738
        %v740 = vpop.f32.mrb[0].mxu0
        %v741 = vadd.f32 %v666, %v740
        %742 = vdwg.mxu0
        %743 = vmatprep.subr.mxu0 %v648
        %744 = vmatpush1.msra.mxu0 %v647
        %745 = vmatprep.subr.mxu0 %v652
        %746 = vmatpush1.msra.mxu0 %v651
        %747 = vmatprep.subr.mxu0 %v656
        %748 = vmatpush1.msra.mxu0 %v655
        %749 = vmatprep.subr.mxu0 %v660
        %750 = vmatpush1.msra.mxu0 %v659
        %751 = vmatprep.subr.mxu0 0.0
        %752 = vmatpush1.msra.mxu0 0.0
        %753 = vmatprep.subr.mxu0 0.0
        %754 = vmatpush1.msra.mxu0 0.0
        %755 = vmatprep.subr.mxu0 0.0
        %756 = vmatpush1.msra.mxu0 0.0
        %757 = vmatprep.subr.mxu0 0.0
        %758 = vmatpush1.msra.mxu0 0.0
        %759 = vmatprep.subr.mxu0 0.0
        %760 = vmatpush1.msra.mxu0 0.0
        %761 = vmatprep.subr.mxu0 0.0
        %762 = vmatpush1.msra.mxu0 0.0
        %763 = vmatprep.subr.mxu0 0.0
        %764 = vmatpush1.msra.mxu0 0.0
        %765 = vmatprep.subr.mxu0 0.0
        %766 = vmatpush1.msra.mxu0 0.0
        %767 = vmatprep.subr.mxu0 0.0
        %768 = vmatpush1.msra.mxu0 0.0
        %769 = vmatprep.subr.mxu0 0.0
        %770 = vmatpush1.msra.mxu0 0.0
        %771 = vmatprep.subr.mxu0 0.0
        %772 = vmatpush1.msra.mxu0 0.0
        %773 = vmatprep.subr.mxu0 0.0
        %774 = vmatpush1.msra.mxu0 0.0
        %775 = vmatprep.subr.mxu0 0.0
        %776 = vmatpush1.msra.mxu0 0.0
        %777 = vmatprep.subr.mxu0 0.0
        %778 = vmatpush1.msra.mxu0 0.0
        %779 = vmatprep.subr.mxu0 0.0
        %780 = vmatpush1.msra.mxu0 0.0
        %781 = vmatprep.subr.mxu0 0.0
        %782 = vmatpush1.msra.mxu0 0.0
        %783 = vmatprep.subr.mxu0 0.0
        %784 = vmatpush1.msra.mxu0 0.0
        %785 = vmatprep.subr.mxu0 0.0
        %786 = vmatpush1.msra.mxu0 0.0
        %787 = vmatprep.subr.mxu0 0.0
        %788 = vmatpush1.msra.mxu0 0.0
        %789 = vmatprep.subr.mxu0 0.0
        %790 = vmatpush1.msra.mxu0 0.0
        %791 = vmatprep.subr.mxu0 0.0
        %792 = vmatpush1.msra.mxu0 0.0
        %793 = vmatprep.subr.mxu0 0.0
        %794 = vmatpush1.msra.mxu0 0.0
        %795 = vmatprep.subr.mxu0 0.0
        %796 = vmatpush1.msra.mxu0 0.0
        %797 = vmatprep.subr.mxu0 0.0
        %798 = vmatpush1.msra.mxu0 0.0
        %799 = vmatprep.subr.mxu0 0.0
        %800 = vmatpush1.msra.mxu0 0.0
        %801 = vmatprep.subr.mxu0 0.0
        %802 = vmatpush1.msra.mxu0 0.0
        %803 = vmatprep.subr.mxu0 0.0
        %804 = vmatpush1.msra.mxu0 0.0
        %805 = vmatprep.subr.mxu0 0.0
        %806 = vmatpush1.msra.mxu0 0.0
        %807 = vmatprep.mubr.f32.mxu0 0.0
        %808 = vmatmul.mubr.f32.gmra.mrb[0].mxu0 %v670
        %v809 = vpop.f32.mrb[0].mxu0
        %v810 = vadd.f32 %v666, %v809
        %v811 = vpop.f32.mrb[0].mxu0
        %v812 = vadd.f32 %v666, %v811
        %813 = vdwg.mxu0
        %v818 = vcombine.low %v739, %v741
        %v819 = vcombine.low %v810, %v812
        %v821 = vunpack.c.l.s4 1983009808
        %v822 = vunpack.c.0.s8 %v821
        %v823 = vlaneseq
        %v824 = vshrl.u32 %v823, 7
        %v825 = vsub.s32 %v822, %v824
        %v826 = vrot.slane %v818, %v825
        %v828 = vunpack.c.l.s4 1983009808
        %v829 = vunpack.c.0.s8 %v828
        %v830 = vlaneseq
        %v831 = vshrl.u32 %v830, 7
        %v832 = vsub.s32 %v829, %v831
        %v833 = vrot.slane %v819, %v832
        %v834 = vcombine.low %v826, %v833
        %836 = vst [vmem:[%s272] sm:$0xff] %v834
        %s837 = sand.u32 %s181, 1
        %s838 = scalar_lea.sflag [#allocation3], %s837
        %s839 = sand.u32 %s181, 1
        %s840 = smul.addr %s839, 8
        %s841 = scalar_lea.vmem [#allocation2], %s840
        // Predicated region
        $region49: #{tpu_custom_call.1} parent=47 // pred_check
          %p842 = pneg %p191
        $region50: #{tpu_custom_call.1} parent=47 // pred_check_branch
          %844 = sbr.rel (%p842) target = $region52
        $region51: #{tpu_custom_call.1} parent=47 // pred_region
          %s845 = smul.u32 4, %s21
          %s847 = ssub.s32 128, 128
          %848 = vsyncadd %s838, %s847
          %s849 = smul.addr %s845, 32
          %s850 = scalar_lea.hbm %s7, %s849
          %s852 = sshll.u32 %s841, 4
          %s853 = int_to_ptr.vmem [resolvable:$true] %s852
          %855 = dma.vmem_to_hbm [thread:$0]  %s853, 128, %s850, %s838
        $region52: #{tpu_custom_call.1} parent=47 // pred_fallthru
          _
      $region48: #{tpu_custom_call.1} parent=5 // pred_fallthru
        _
      %p856 = scmp.le.s32.totalorder 2, %s16
      // Predicated region
      $region53: #{tpu_custom_call.1} parent=5 // pred_check
        %p857 = pneg %p856
      $region54: #{tpu_custom_call.1} parent=5 // pred_check_branch
        %859 = sbr.rel (%p857) target = $region56
      $region55: #{tpu_custom_call.1} parent=5 // pred_region
        %s860 = ssub.s32 %s16, 2
        // Predicated region
        $region57: #{tpu_custom_call.1} parent=55 // pred_check
          %p861 = pneg %p197
        $region58: #{tpu_custom_call.1} parent=55 // pred_check_branch
          %863 = sbr.rel (%p861) target = $region60
        $region59: #{tpu_custom_call.1} parent=55 // pred_region
          %s864 = sand.u32 %s182, 1
          %s865 = scalar_lea.sflag [#allocation3], %s864
          %s866 = sand.u32 %s182, 1
          %s867 = smul.addr %s866, 8
          %s868 = scalar_lea.vmem [#allocation2], %s867
          %869 = dma.done %s865, 128
        $region60: #{tpu_custom_call.1} parent=55 // pred_fallthru
          _
      $region56: #{tpu_custom_call.1} parent=5 // pred_fallthru
        _
    $region6: #{tpu_custom_call.1} parent=1 // loop_footer
      %s20 = sadd.s32 1, %s16
    $region7: #{tpu_custom_call.1} parent=1 // loop_footer_branch
      %15 = sbr.rel target = $region3
    $region8: #{tpu_custom_call.1} parent=1 // loop_exit
      _
    %870 = vsyncpa [#allocation3], 1
    %s871 = scalar_lea.sflag [#allocation3], 1
    %872 = vsyncpa %s871, 1

</llo_original>
